<compile_context>
chip_gen: v6e
topology: v6e:2x2x1
jax: 0.10.0
libtpu: 0.0.40
codegen_flags: <defaults>
</compile_context>

<pallas_src>
import functools

import jax
import jax.numpy as jnp
from jax.experimental import pallas as pl
from jax.experimental.pallas import tpu as pltpu


def _choose_block_rows(m, target):
    """Largest multiple-of-8 divisor of m that is <= target (or m itself)."""
    if m <= target:
        return m
    start = target - (target % 8)
    for tm in range(start, 7, -8):
        if m % tm == 0:
            return tm
    return m  # no aligned divisor found; fall back to a single full block


def _up_concat_kernel(x_ref, down_ref, w_ref, b_ref, out_ref, *, cd4):
    """One M-tile of the fused op.

    x_ref    : (TM, Cin)           one row per input spatial location
    down_ref : (TM, Cd*4)          skip connection, columns (c, p), p = 2*f + g
    w_ref    : (Cin, Cout*4)       deconv weight, columns (oc, p)
    b_ref    : (1, Cout*4)         bias replicated over p, f32
    out_ref  : (TM, (Cd+Cout)*4)   columns (channel, p); channels ordered
                                   [down channels..., deconv channels...]
    """
    acc = jnp.dot(x_ref[...], w_ref[...], preferred_element_type=jnp.float32)
    y = (acc + b_ref[...]).astype(out_ref.dtype)            # bias add in f32, then cast
    out_ref[:, :cd4] = down_ref[...].astype(out_ref.dtype)  # skip-connection slab
    out_ref[:, cd4:] = y                                     # deconv slab


def up_concat_forward(inputs, down_outputs, weight, bias, *, block_rows=512):
    """UpConcat.forward: ConvTranspose2d(k=2, s=2)(inputs) then channel concat.

    inputs       : (B, Cin, H, W)      NCHW (PyTorch layout)
    down_outputs : (B, Cd, 2H, 2W)
    weight       : (Cin, Cout, 2, 2)   PyTorch ConvTranspose2d weight layout
    bias         : (Cout,)
    returns      : (B, Cd + Cout, 2H, 2W)  NCHW
    """
    B, Cin, H, W = inputs.shape
    Cout = weight.shape[1]
    Cd = down_outputs.shape[1]
    Ctot = Cd + Cout
    M = B * H * W
    assert down_outputs.shape == (B, Cd, 2 * H, 2 * W), down_outputs.shape

    out_dtype = inputs.dtype

    # --- boundary layout glue (NCHW API -> lane-dense TPU layouts) ------------
    # x: NCHW -> NHWC -> (M, Cin)
    x_flat = jnp.transpose(inputs, (0, 2, 3, 1)).reshape(M, Cin)
    # down: NCHW -> (b, h, w, c, f, g) -> (M, Cd*4), columns (c, p)
    down_flat = (down_outputs.reshape(B, Cd, H, 2, W, 2)
                 .transpose(0, 2, 4, 1, 3, 5)
                 .reshape(M, Cd * 4)).astype(out_dtype)
    # weight: (Cin, Cout, 2, 2) -> (Cin, Cout*4), columns (oc, p)  (pure reshape)
    w_mat = weight.reshape(Cin, Cout * 4).astype(out_dtype)
    # bias replicated per patch position p; keep f32 for the f32-accum epilogue
    b_mat = jnp.repeat(bias.astype(jnp.float32), 4).reshape(1, Cout * 4)

    tm = _choose_block_rows(M, block_rows)
    grid = (M // tm,)

    itemsize = jnp.dtype(out_dtype).itemsize
    tile_bytes = tm * (Cin + 4 * Cd + 4 * Ctot) * itemsize
    resident_bytes = Cin * 4 * Cout * itemsize + 4 * Cout * 4
    # double-buffered tiles + resident weights, with headroom; clamp so it is
    # valid on every generation (v7x physical VMEM is only 64 MiB/TC).
    vmem_limit = int(min(max(2 * (2 * tile_bytes + resident_bytes), 16 * 2**20),
                         48 * 2**20))

    flops = 2 * M * Cin * 4 * Cout
    bytes_accessed = ((x_flat.size + down_flat.size + w_mat.size) * itemsize
                      + b_mat.size * 4 + M * 4 * Ctot * itemsize)

    kernel = functools.partial(_up_concat_kernel, cd4=Cd * 4)

    out_flat = pl.pallas_call(
        kernel,
        out_shape=jax.ShapeDtypeStruct((M, 4 * Ctot), out_dtype),
        grid=grid,
        in_specs=[
            pl.BlockSpec((tm, Cin), lambda i: (i, 0)),
            pl.BlockSpec((tm, 4 * Cd), lambda i: (i, 0)),
            pl.BlockSpec((Cin, 4 * Cout), lambda i: (0, 0)),   # VMEM-resident
            pl.BlockSpec((1, 4 * Cout), lambda i: (0, 0)),     # VMEM-resident
        ],
        out_specs=pl.BlockSpec((tm, 4 * Ctot), lambda i: (i, 0)),
        compiler_params=pltpu.CompilerParams(
            dimension_semantics=("parallel",),
            vmem_limit_bytes=vmem_limit,
        ),
        cost_estimate=pl.CostEstimate(
            flops=flops, transcendentals=0, bytes_accessed=bytes_accessed),
    )(x_flat, down_flat, w_mat, b_mat)

    # (M, Ctot*4) (channel, p) layout -> (B, Ctot, 2H, 2W) NCHW (PyTorch layout)
    out = out_flat.reshape(B, H, W, Ctot, 2, 2)
    out = jnp.transpose(out, (0, 3, 1, 4, 2, 5)).reshape(B, Ctot, 2 * H, 2 * W)
    return out


def _reference_forward(inputs, down_outputs, weight, bias):
    """Pure-JAX reference of ConvTranspose2d(k=2, s=2) + concat (no Pallas)."""
    B, Cin, H, W = inputs.shape
    Cout = weight.shape[1]
    # y[b, o, 2h+f, 2w+g] = sum_c x[b,c,h,w] * W[c,o,f,g] + bias[o]
    t = jnp.einsum("bchw,cofg->bohfwg", inputs, weight)
    y = t.reshape(B, Cout, 2 * H, 2 * W) + bias[None, :, None, None]
    return jnp.concatenate([down_outputs, y], axis=1)


if __name__ == "__main__":
    key = jax.random.PRNGKey(0)
    k_x, k_d, k_w, k_b = jax.random.split(key, 4)

    B, in_feat, out_feat, H, W = 2, 8, 4, 16, 16
    Cd = 4  # channels of the skip connection (down_outputs)

    inputs = jax.random.normal(k_x, (B, in_feat, H, W), dtype=jnp.float32)
    down_outputs = jax.random.normal(k_d, (B, Cd, 2 * H, 2 * W), dtype=jnp.float32)

    # Deterministic synthetic parameters (ConvTranspose2d weight/bias shapes).
    weight = 0.1 * jax.random.normal(k_w, (in_feat, out_feat, 2, 2), dtype=jnp.float32)
    bias = 0.1 * jax.random.normal(k_b, (out_feat,), dtype=jnp.float32)

    # block_rows=128 -> M = B*H*W = 512 rows, grid=(4,): exercises the tiled,
    # pipelined, "parallel" path (defaults to 512-row tiles for larger layers).
    out = up_concat_forward(inputs, down_outputs, weight, bias, block_rows=128)
    out = jax.block_until_ready(out)

    ref = _reference_forward(inputs, down_outputs, weight, bias)
    assert out.shape == (B, Cd + out_feat, 2 * H, 2 * W), out.shape
    assert jnp.allclose(out, ref, atol=1e-5, rtol=1e-5), "mismatch vs reference"

    print("KERNEL_OK")
</pallas_src>

<mosaic_0001>
module attributes {stable_mosaic.version = 11 : i64} {
  func.func @_up_concat_kernel(%arg0: i32, %arg1: memref<128x8xf32, #tpu.memory_space<vmem>>, %arg2: memref<128x16xf32, #tpu.memory_space<vmem>>, %arg3: memref<8x16xf32, #tpu.memory_space<vmem>>, %arg4: memref<1x16xf32, #tpu.memory_space<vmem>>, %arg5: memref<128x32xf32, #tpu.memory_space<vmem>>) attributes {dimension_semantics = [#tpu.dimension_semantics<parallel>], iteration_bounds = array<i64: 4>, scalar_prefetch = 0 : i64, scratch_operands = 0 : i64, tpu.core_type = #tpu.core_type<tc>, window_params = [{transform_indices = @transform_0, window_bounds = array<i64: 128, 8>}, {transform_indices = @transform_1, window_bounds = array<i64: 128, 16>}, {pipeline_mode = #tpu.pipeline_mode<synchronous>, transform_indices = @transform_2, window_bounds = array<i64: 8, 16>}, {pipeline_mode = #tpu.pipeline_mode<synchronous>, transform_indices = @transform_3, window_bounds = array<i64: 1, 16>}, {transform_indices = @transform_4, window_bounds = array<i64: 128, 32>}]} {
    %c0 = arith.constant 0 : index
    %c0_0 = arith.constant 0 : index
    %0 = vector.load %arg1[%c0, %c0_0] : memref<128x8xf32, #tpu.memory_space<vmem>>, vector<128x8xf32>
    %c0_1 = arith.constant 0 : index
    %c0_2 = arith.constant 0 : index
    %1 = vector.load %arg3[%c0_1, %c0_2] : memref<8x16xf32, #tpu.memory_space<vmem>>, vector<8x16xf32>
    %cst = arith.constant dense<0.000000e+00> : vector<128x16xf32>
    %2 = tpu.matmul %0, %1, %cst {dimension_numbers = #tpu.dot_dimension_numbers<[1], [0], [0], [1], [0, 0, 1, 1], [], []>} : vector<128x8xf32>, vector<8x16xf32>, vector<128x16xf32> -> vector<128x16xf32>
    %c0_3 = arith.constant 0 : index
    %c0_4 = arith.constant 0 : index
    %3 = vector.load %arg4[%c0_3, %c0_4] : memref<1x16xf32, #tpu.memory_space<vmem>>, vector<1x16xf32>
    %4 = vector.broadcast %3 : vector<1x16xf32> to vector<128x16xf32>
    %5 = arith.addf %2, %4 : vector<128x16xf32>
    %c0_5 = arith.constant 0 : index
    %c0_6 = arith.constant 0 : index
    %6 = vector.load %arg2[%c0_5, %c0_6] : memref<128x16xf32, #tpu.memory_space<vmem>>, vector<128x16xf32>
    %c0_7 = arith.constant 0 : index
    %c0_8 = arith.constant 0 : index
    %7 = vector.load %arg5[%c0_7, %c0_8] : memref<128x32xf32, #tpu.memory_space<vmem>>, vector<128x16xf32>
    tpu.vector_store %arg5[%c0_7, %c0_8], %6 {strides = array<i32>} : memref<128x32xf32, #tpu.memory_space<vmem>>, vector<128x16xf32>,
    %c0_9 = arith.constant 0 : index
    %c16 = arith.constant 16 : index
    %8 = vector.load %arg5[%c0_9, %c16] : memref<128x32xf32, #tpu.memory_space<vmem>>, vector<128x16xf32>
    tpu.vector_store %arg5[%c0_9, %c16], %5 {strides = array<i32>} : memref<128x32xf32, #tpu.memory_space<vmem>>, vector<128x16xf32>,
    return
  }
  func.func @transform_0(%arg0: i32) -> (i32, i32) {
    %c0_i32 = arith.constant 0 : i32
    %c0_i32_0 = arith.constant 0 : i32
    return %arg0, %c0_i32 : i32, i32
  }
  func.func @transform_1(%arg0: i32) -> (i32, i32) {
    %c0_i32 = arith.constant 0 : i32
    %c0_i32_0 = arith.constant 0 : i32
    return %arg0, %c0_i32 : i32, i32
  }
  func.func @transform_2(%arg0: i32) -> (i32, i32) {
    %c0_i32 = arith.constant 0 : i32
    %c0_i32_0 = arith.constant 0 : i32
    %c0_i32_1 = arith.constant 0 : i32
    return %c0_i32, %c0_i32_0 : i32, i32
  }
  func.func @transform_3(%arg0: i32) -> (i32, i32) {
    %c0_i32 = arith.constant 0 : i32
    %c0_i32_0 = arith.constant 0 : i32
    %c0_i32_1 = arith.constant 0 : i32
    return %c0_i32, %c0_i32_0 : i32, i32
  }
  func.func @transform_4(%arg0: i32) -> (i32, i32) {
    %c0_i32 = arith.constant 0 : i32
    %c0_i32_0 = arith.constant 0 : i32
    return %arg0, %c0_i32 : i32, i32
  }
}

</mosaic_0001>

<llo_original>
// kernel: tpu_custom_call.1
$region0: #{tpu_custom_call.1}
  #allocation0 [shape = 'u32[]', space=smem, size = 0x4, offset = 0x4, fixed_abs, tag = 'smem constant byte address 0x4 - core index']
  #allocation1 [shape = 'u32[144,128]{1,0:T(1,128)}', space=vmem, size = 0x12000, scoped, tag = 'internal scratch']
  %s0 = inlined_call_operand.vmem [shape: f32[512,8], index: 0, kind: input, shape index: {}]
  %s1 = inlined_call_operand.vmem [shape: f32[512,16], index: 1, kind: input, shape index: {}]
  %s2 = inlined_call_operand.vmem [shape: f32[8,16], index: 2, kind: input, shape index: {}]
  %s3 = inlined_call_operand.vmem [shape: f32[1,16], index: 3, kind: input, shape index: {}]
  %s4 = inlined_call_operand.vmem [shape: f32[512,32], index: 4, kind: output, shape index: {}]
  %s5 = sld [smem:[#allocation0]]
  $region49: #{tpu_custom_call.1} parent=0
    _
  %s7 = ssub.s32 1, %s5
  %s8 = scalar_select 0, %s7, %s5
  loop: start=0, step=1, limit=6
  $region2: #{tpu_custom_call.1} parent=0 // loop_pre_header
    _
  $region3: #{tpu_custom_call.1} parent=0 // loop_header
    %s10 = sphi 0, %s14
    %p11 = scmp.ge.s32.totalorder %s10, 6
    %s20 = sphi 0, %s22
    %s23 = sphi 0, %s20
    %s24 = sphi 0, %s23
    %s40 = sphi 0, %s24
    %s46 = sphi 0, %s48
    %s49 = sphi 0, %s46
    %s50 = sphi 0, %s49
    %s66 = sphi 0, %s50
    %s70 = sphi 0, %s70
    %s72 = sphi 0, %s70
    %s73 = sphi 0, %s72
    %s87 = sphi 0, %s73
    %s91 = sphi 0, %s91
    %s93 = sphi 0, %s91
    %s94 = sphi 0, %s93
    %s108 = sphi 0, %s94
    %s114 = sphi 0, %s116
    %s117 = sphi 0, %s114
    %s118 = sphi 0, %s117
    %s134 = sphi 0, %s118
  $region4: #{tpu_custom_call.1} parent=0 // loop_header_branch
    %13 = sbr.rel (%p11) target = $region8
  $region5: #{tpu_custom_call.1} parent=0 // loop_body
    %s15 = ssub.s32 %s10, 1
    %s16 = ssub.s32 %s10, 2
    %s17 = sadd.s32 %s10, 1
    %s18 = ssub.s32 %s10, %s17
    %p19 = scmp.eq.s32.totalorder %s18, 0
    %s21 = sadd.s32 %s20, 1
    %s22 = scalar_select %p19, %s20, %s21
    %p25 = pneg %p19
    %p26 = scmp.eq.s32.totalorder %s10, 3
    %p27 = por %p25, %p26
    %p28 = scmp.ne.s32.totalorder %s20, %s23
    %p29 = scmp.eq.s32.totalorder %s10, 0
    %p30 = por %p28, %p29
    %p31 = scmp.ne.s32.totalorder %s20, %s23
    %p32 = scmp.eq.s32.totalorder %s15, 3
    %p33 = por %p31, %p32
    %p34 = scmp.ne.s32.totalorder %s23, %s24
    %p35 = scmp.eq.s32.totalorder %s15, 0
    %p36 = por %p34, %p35
    %p37 = scmp.ne.s32.totalorder %s23, %s24
    %p38 = scmp.eq.s32.totalorder %s16, 3
    %p39 = por %p37, %p38
    %p41 = scmp.ne.s32.totalorder %s24, %s40
    %p42 = scmp.eq.s32.totalorder %s16, 0
    %p43 = por %p41, %p42
    %s44 = ssub.s32 %s10, %s17
    %p45 = scmp.eq.s32.totalorder %s44, 0
    %s47 = sadd.s32 %s46, 1
    %s48 = scalar_select %p45, %s46, %s47
    %p51 = pneg %p45
    %p52 = scmp.eq.s32.totalorder %s10, 3
    %p53 = por %p51, %p52
    %p54 = scmp.ne.s32.totalorder %s46, %s49
    %p55 = scmp.eq.s32.totalorder %s10, 0
    %p56 = por %p54, %p55
    %p57 = scmp.ne.s32.totalorder %s46, %s49
    %p58 = scmp.eq.s32.totalorder %s15, 3
    %p59 = por %p57, %p58
    %p60 = scmp.ne.s32.totalorder %s49, %s50
    %p61 = scmp.eq.s32.totalorder %s15, 0
    %p62 = por %p60, %p61
    %p63 = scmp.ne.s32.totalorder %s49, %s50
    %p64 = scmp.eq.s32.totalorder %s16, 3
    %p65 = por %p63, %p64
    %p67 = scmp.ne.s32.totalorder %s50, %s66
    %p68 = scmp.eq.s32.totalorder %s16, 0
    %p69 = por %p67, %p68
    %s71 = sadd.s32 %s70, 1
    %p74 = scmp.eq.s32.totalorder %s10, 3
    %p75 = scmp.ne.s32.totalorder %s70, %s72
    %p76 = scmp.eq.s32.totalorder %s10, 0
    %p77 = por %p75, %p76
    %p78 = scmp.ne.s32.totalorder %s70, %s72
    %p79 = scmp.eq.s32.totalorder %s15, 3
    %p80 = por %p78, %p79
    %p81 = scmp.ne.s32.totalorder %s72, %s73
    %p82 = scmp.eq.s32.totalorder %s15, 0
    %p83 = por %p81, %p82
    %p84 = scmp.ne.s32.totalorder %s72, %s73
    %p85 = scmp.eq.s32.totalorder %s16, 3
    %p86 = por %p84, %p85
    %p88 = scmp.ne.s32.totalorder %s73, %s87
    %p89 = scmp.eq.s32.totalorder %s16, 0
    %p90 = por %p88, %p89
    %s92 = sadd.s32 %s91, 1
    %p95 = scmp.eq.s32.totalorder %s10, 3
    %p96 = scmp.ne.s32.totalorder %s91, %s93
    %p97 = scmp.eq.s32.totalorder %s10, 0
    %p98 = por %p96, %p97
    %p99 = scmp.ne.s32.totalorder %s91, %s93
    %p100 = scmp.eq.s32.totalorder %s15, 3
    %p101 = por %p99, %p100
    %p102 = scmp.ne.s32.totalorder %s93, %s94
    %p103 = scmp.eq.s32.totalorder %s15, 0
    %p104 = por %p102, %p103
    %p105 = scmp.ne.s32.totalorder %s93, %s94
    %p106 = scmp.eq.s32.totalorder %s16, 3
    %p107 = por %p105, %p106
    %p109 = scmp.ne.s32.totalorder %s94, %s108
    %p110 = scmp.eq.s32.totalorder %s16, 0
    %p111 = por %p109, %p110
    %s112 = ssub.s32 %s10, %s17
    %p113 = scmp.eq.s32.totalorder %s112, 0
    %s115 = sadd.s32 %s114, 1
    %s116 = scalar_select %p113, %s114, %s115
    %p119 = pneg %p113
    %p120 = scmp.eq.s32.totalorder %s10, 3
    %p121 = por %p119, %p120
    %p122 = scmp.ne.s32.totalorder %s114, %s117
    %p123 = scmp.eq.s32.totalorder %s10, 0
    %p124 = por %p122, %p123
    %p125 = scmp.ne.s32.totalorder %s114, %s117
    %p126 = scmp.eq.s32.totalorder %s15, 3
    %p127 = por %p125, %p126
    %p128 = scmp.ne.s32.totalorder %s117, %s118
    %p129 = scmp.eq.s32.totalorder %s15, 0
    %p130 = por %p128, %p129
    %p131 = scmp.ne.s32.totalorder %s117, %s118
    %p132 = scmp.eq.s32.totalorder %s16, 3
    %p133 = por %p131, %p132
    %p135 = scmp.ne.s32.totalorder %s118, %s134
    %p136 = scmp.eq.s32.totalorder %s16, 0
    %p137 = por %p135, %p136
    %p138 = scmp.le.s32.totalorder 1, %s10
    %p139 = scmp.lt.s32.totalorder %s10, 5
    %p140 = pnand %p138, %p139
    %p141 = pneg %p140
    // Predicated region
    $region9: #{tpu_custom_call.1} parent=5 // pred_check
      _
    $region10: #{tpu_custom_call.1} parent=5 // pred_check_branch
      %143 = sbr.rel (%p140) target = $region12
    $region11: #{tpu_custom_call.1} parent=5 // pred_region
      %s144 = ssub.s32 %s10, 1
      // Predicated region
      $region13: #{tpu_custom_call.1} parent=11 // pred_check
        %p145 = pneg %p83
      $region14: #{tpu_custom_call.1} parent=11 // pred_check_branch
        %147 = sbr.rel (%p145) target = $region16
      $region15: #{tpu_custom_call.1} parent=11 // pred_region
        _
      $region16: #{tpu_custom_call.1} parent=11 // pred_fallthru
        _
      // Predicated region
      $region17: #{tpu_custom_call.1} parent=11 // pred_check
        %p148 = pneg %p104
      $region18: #{tpu_custom_call.1} parent=11 // pred_check_branch
        %150 = sbr.rel (%p148) target = $region20
      $region19: #{tpu_custom_call.1} parent=11 // pred_region
        _
      $region20: #{tpu_custom_call.1} parent=11 // pred_fallthru
        _
    $region12: #{tpu_custom_call.1} parent=5 // pred_fallthru
      _
    %p151 = scmp.lt.s32.totalorder %s10, 4
    // Predicated region
    $region21: #{tpu_custom_call.1} parent=5 // pred_check
      %p152 = pneg %p151
    $region22: #{tpu_custom_call.1} parent=5 // pred_check_branch
      %154 = sbr.rel (%p152) target = $region24
    $region23: #{tpu_custom_call.1} parent=5 // pred_region
      // Predicated region
      $region25: #{tpu_custom_call.1} parent=23 // pred_check
        %p155 = pneg %p30
      $region26: #{tpu_custom_call.1} parent=23 // pred_check_branch
        %157 = sbr.rel (%p155) target = $region28
      $region27: #{tpu_custom_call.1} parent=23 // pred_region
        %s158 = smul.u32 16, %s10
        %p159 = scmp.lt.s32.totalorder %s158, 63
        %s160 = scalar_select %p159, %s158, 63
        %s161 = smul.addr %s160, 8
        %s162 = scalar_lea.vmem %s0, %s161
        %s163 = smul.u32 16, %s10
      $region28: #{tpu_custom_call.1} parent=23 // pred_fallthru
        _
      // Predicated region
      $region29: #{tpu_custom_call.1} parent=23 // pred_check
        %p164 = pneg %p56
      $region30: #{tpu_custom_call.1} parent=23 // pred_check_branch
        %166 = sbr.rel (%p164) target = $region32
      $region31: #{tpu_custom_call.1} parent=23 // pred_region
        %s167 = smul.u32 16, %s10
        %p168 = scmp.lt.s32.totalorder %s167, 63
        %s169 = scalar_select %p168, %s167, 63
        %s170 = smul.addr %s169, 8
        %s171 = scalar_lea.vmem %s1, %s170
        %s172 = smul.u32 16, %s10
      $region32: #{tpu_custom_call.1} parent=23 // pred_fallthru
        _
    $region24: #{tpu_custom_call.1} parent=5 // pred_fallthru
      _
    %p173 = scmp.le.s32.totalorder 1, %s10
    %p174 = scmp.lt.s32.totalorder %s10, 5
    %p175 = pnand %p173, %p174
    %p176 = pneg %p175
    // Predicated region
    $region33: #{tpu_custom_call.1} parent=5 // pred_check
      _
    $region34: #{tpu_custom_call.1} parent=5 // pred_check_branch
      %178 = sbr.rel (%p175) target = $region36
    $region35: #{tpu_custom_call.1} parent=5 // pred_region
      %s179 = ssub.s32 %s10, 1
      %s180 = smul.u32 16, %s15
      %p181 = scmp.lt.s32.totalorder %s180, 63
      %s182 = scalar_select %p181, %s180, 63
      %s183 = smul.addr %s182, 8
      %s184 = scalar_lea.vmem %s0, %s183
      %p185 = pneg %p36
      %p186 = pneg %p33
      %s187 = smul.u32 16, %s15
      %p188 = scmp.lt.s32.totalorder %s187, 63
      %s189 = scalar_select %p188, %s187, 63
      %s190 = smul.addr %s189, 8
      %s191 = scalar_lea.vmem %s1, %s190
      %p192 = pneg %p62
      %p193 = pneg %p59
      %p194 = pneg %p83
      %p195 = pneg %p80
      %p196 = pneg %p104
      %p197 = pneg %p101
      %p198 = pneg %p130
      %p199 = pneg %p127
      %s200 = smul.u32 16, %s15
      %p201 = scmp.lt.s32.totalorder %s200, 63
      %s202 = scalar_select %p201, %s200, 63
      %s203 = smul.addr %s202, 8
      %s204 = scalar_lea.vmem %s4, %s203
      %s205 = smul.u32 16, %s15
      %p206 = scmp.lt.s32.totalorder %s205, 63
      %s207 = scalar_select %p206, %s205, 63
      %s208 = smul.addr %s207, 8
      %s209 = scalar_lea.vmem %s0, %s208
      %s210 = smul.u32 16, %s15
      %s211 = smul.u32 16, %s15
      %p212 = scmp.lt.s32.totalorder %s211, 63
      %s213 = scalar_select %p212, %s211, 63
      %s214 = smul.addr %s213, 8
      %s215 = scalar_lea.vmem %s1, %s214
      %s216 = smul.u32 16, %s15
      %s217 = smul.u32 16, %s15
      %p218 = scmp.lt.s32.totalorder %s217, 63
      %s219 = scalar_select %p218, %s217, 63
      %s220 = smul.addr %s219, 8
      %s221 = scalar_lea.vmem %s4, %s220
      %s222 = smul.u32 16, %s15
      %v223 = vld [vmem:[%s209] sm:$0xff]
      %v224 = vld [vmem:[%s209 + $0x8] sm:$0xff]
      %v225 = vld [vmem:[%s209 + $0x10] sm:$0xff]
      %v226 = vld [vmem:[%s209 + $0x18] sm:$0xff]
      %v227 = vld [vmem:[%s209 + $0x20] sm:$0xff]
      %v228 = vld [vmem:[%s209 + $0x28] sm:$0xff]
      %v229 = vld [vmem:[%s209 + $0x30] sm:$0xff]
      %v230 = vld [vmem:[%s209 + $0x38] sm:$0xff]
      %v231 = vld [vmem:[%s209 + $0x40] sm:$0xff]
      %v232 = vld [vmem:[%s209 + $0x48] sm:$0xff]
      %v233 = vld [vmem:[%s209 + $0x50] sm:$0xff]
      %v234 = vld [vmem:[%s209 + $0x58] sm:$0xff]
      %v235 = vld [vmem:[%s209 + $0x60] sm:$0xff]
      %v236 = vld [vmem:[%s209 + $0x68] sm:$0xff]
      %v237 = vld [vmem:[%s209 + $0x70] sm:$0xff]
      %v238 = vld [vmem:[%s209 + $0x78] sm:$0xff]
      %v239 = vld [vmem:[%s2] sm:$0xff]
      %v240 = vld [vmem:[%s3] sm:$0x1]
      %v242 = vlaneseq
      %v243 = vshrl.u32 %v242, 7
      %v244 = vsub.s32 0, %v243
      %v245 = vrot.slane %v240, %v244
      %vm247 = vcmask 64512
      %v249 = vsel %vm247, %v223, 0
      %v252 = vsel %vm247, %v224, 0
      %v255 = vsel %vm247, %v225, 0
      %v258 = vsel %vm247, %v226, 0
      %v261 = vsel %vm247, %v227, 0
      %v264 = vsel %vm247, %v228, 0
      %v267 = vsel %vm247, %v229, 0
      %v270 = vsel %vm247, %v230, 0
      %v273 = vsel %vm247, %v231, 0
      %v276 = vsel %vm247, %v232, 0
      %v279 = vsel %vm247, %v233, 0
      %v282 = vsel %vm247, %v234, 0
      %v285 = vsel %vm247, %v235, 0
      %v288 = vsel %vm247, %v236, 0
      %v291 = vsel %vm247, %v237, 0
      %v294 = vsel %vm247, %v238, 0
      %296 = vmatprep.subr.mxu0 0.0
      %297 = vmatpush1.msra.mxu0 0.0
      %298 = vmatprep.subr.mxu0 0.0
      %299 = vmatpush1.msra.mxu0 0.0
      %300 = vmatprep.subr.mxu0 0.0
      %301 = vmatpush1.msra.mxu0 0.0
      %302 = vmatprep.subr.mxu0 0.0
      %303 = vmatpush1.msra.mxu0 0.0
      %304 = vmatprep.subr.mxu0 0.0
      %305 = vmatpush1.msra.mxu0 0.0
      %306 = vmatprep.subr.mxu0 0.0
      %307 = vmatpush1.msra.mxu0 0.0
      %308 = vmatprep.subr.mxu0 0.0
      %309 = vmatpush1.msra.mxu0 0.0
      %310 = vmatprep.subr.mxu0 0.0
      %311 = vmatpush1.msra.mxu0 0.0
      %312 = vmatprep.subr.mxu0 0.0
      %313 = vmatpush1.msra.mxu0 0.0
      %314 = vmatprep.subr.mxu0 0.0
      %315 = vmatpush1.msra.mxu0 0.0
      %316 = vmatprep.subr.mxu0 0.0
      %317 = vmatpush1.msra.mxu0 0.0
      %318 = vmatprep.subr.mxu0 0.0
      %319 = vmatpush1.msra.mxu0 0.0
      %320 = vmatprep.subr.mxu0 0.0
      %321 = vmatpush1.msra.mxu0 0.0
      %322 = vmatprep.subr.mxu0 0.0
      %323 = vmatpush1.msra.mxu0 0.0
      %324 = vmatprep.subr.mxu0 0.0
      %325 = vmatpush1.msra.mxu0 0.0
      %326 = vmatprep.subr.mxu0 0.0
      %327 = vmatpush1.msra.mxu0 %v239
      %328 = vmatprep.subr.mxu0 0.0
      %329 = vmatpush2.msra.mxu0 0.0
      %330 = vmatprep.subr.mxu0 0.0
      %331 = vmatpush2.msra.mxu0 0.0
      %332 = vmatprep.subr.mxu0 0.0
      %333 = vmatpush2.msra.mxu0 0.0
      %334 = vmatprep.subr.mxu0 0.0
      %335 = vmatpush2.msra.mxu0 0.0
      %336 = vmatprep.subr.mxu0 0.0
      %337 = vmatpush2.msra.mxu0 0.0
      %338 = vmatprep.subr.mxu0 0.0
      %339 = vmatpush2.msra.mxu0 0.0
      %340 = vmatprep.subr.mxu0 0.0
      %341 = vmatpush2.msra.mxu0 0.0
      %342 = vmatprep.subr.mxu0 0.0
      %343 = vmatpush2.msra.mxu0 0.0
      %344 = vmatprep.subr.mxu0 0.0
      %345 = vmatpush2.msra.mxu0 0.0
      %346 = vmatprep.subr.mxu0 0.0
      %347 = vmatpush2.msra.mxu0 0.0
      %348 = vmatprep.subr.mxu0 0.0
      %349 = vmatpush2.msra.mxu0 0.0
      %350 = vmatprep.subr.mxu0 0.0
      %351 = vmatpush2.msra.mxu0 0.0
      %352 = vmatprep.subr.mxu0 0.0
      %353 = vmatpush2.msra.mxu0 0.0
      %354 = vmatprep.subr.mxu0 0.0
      %355 = vmatpush2.msra.mxu0 0.0
      %356 = vmatprep.subr.mxu0 0.0
      %357 = vmatpush2.msra.mxu0 0.0
      %358 = vmatprep.subr.mxu0 0.0
      %359 = vmatpush2.msra.mxu0 0.0
      %360 = vmatprep.mubr.f32.mxu0 0.0
      %361 = vmatmul.mubr.f32.gmra.mxu0 %v249
      %v362 = vpop.f32.mrf.mxu0
      %v363 = vadd.f32 %v245, %v362
      %v364 = vpop.f32.mrf.mxu0
      %365 = vmatprep.mubr.f32.mxu0 0.0
      %366 = vmatmul.mubr.f32.gmra.mxu0 %v252
      %v367 = vpop.f32.mrf.mxu0
      %v368 = vadd.f32 %v245, %v367
      %v369 = vpop.f32.mrf.mxu0
      %370 = vmatprep.mubr.f32.mxu0 0.0
      %371 = vmatmul.mubr.f32.gmra.mxu0 %v255
      %v372 = vpop.f32.mrf.mxu0
      %v373 = vadd.f32 %v245, %v372
      %v374 = vpop.f32.mrf.mxu0
      %375 = vmatprep.mubr.f32.mxu0 0.0
      %376 = vmatmul.mubr.f32.gmra.mxu0 %v258
      %v377 = vpop.f32.mrf.mxu0
      %v378 = vadd.f32 %v245, %v377
      %v379 = vpop.f32.mrf.mxu0
      %380 = vmatprep.mubr.f32.mxu0 0.0
      %381 = vmatmul.mubr.f32.gmra.mxu0 %v261
      %v382 = vpop.f32.mrf.mxu0
      %v383 = vadd.f32 %v245, %v382
      %v384 = vpop.f32.mrf.mxu0
      %385 = vmatprep.mubr.f32.mxu0 0.0
      %386 = vmatmul.mubr.f32.gmra.mxu0 %v264
      %v387 = vpop.f32.mrf.mxu0
      %v388 = vadd.f32 %v245, %v387
      %v389 = vpop.f32.mrf.mxu0
      %390 = vmatprep.mubr.f32.mxu0 0.0
      %391 = vmatmul.mubr.f32.gmra.mxu0 %v267
      %v392 = vpop.f32.mrf.mxu0
      %v393 = vadd.f32 %v245, %v392
      %v394 = vpop.f32.mrf.mxu0
      %395 = vmatprep.mubr.f32.mxu0 0.0
      %396 = vmatmul.mubr.f32.gmra.mxu0 %v270
      %v397 = vpop.f32.mrf.mxu0
      %v398 = vadd.f32 %v245, %v397
      %v399 = vpop.f32.mrf.mxu0
      %400 = vmatprep.mubr.f32.mxu0 0.0
      %401 = vmatmul.mubr.f32.gmra.mxu0 %v273
      %v402 = vpop.f32.mrf.mxu0
      %v403 = vadd.f32 %v245, %v402
      %v404 = vpop.f32.mrf.mxu0
      %405 = vmatprep.mubr.f32.mxu0 0.0
      %406 = vmatmul.mubr.f32.gmra.mxu0 %v276
      %v407 = vpop.f32.mrf.mxu0
      %v408 = vadd.f32 %v245, %v407
      %v409 = vpop.f32.mrf.mxu0
      %410 = vmatprep.mubr.f32.mxu0 0.0
      %411 = vmatmul.mubr.f32.gmra.mxu0 %v279
      %v412 = vpop.f32.mrf.mxu0
      %v413 = vadd.f32 %v245, %v412
      %v414 = vpop.f32.mrf.mxu0
      %415 = vmatprep.mubr.f32.mxu0 0.0
      %416 = vmatmul.mubr.f32.gmra.mxu0 %v282
      %v417 = vpop.f32.mrf.mxu0
      %v418 = vadd.f32 %v245, %v417
      %v419 = vpop.f32.mrf.mxu0
      %420 = vmatprep.mubr.f32.mxu0 0.0
      %421 = vmatmul.mubr.f32.gmra.mxu0 %v285
      %v422 = vpop.f32.mrf.mxu0
      %v423 = vadd.f32 %v245, %v422
      %v424 = vpop.f32.mrf.mxu0
      %425 = vmatprep.mubr.f32.mxu0 0.0
      %426 = vmatmul.mubr.f32.gmra.mxu0 %v288
      %v427 = vpop.f32.mrf.mxu0
      %v428 = vadd.f32 %v245, %v427
      %v429 = vpop.f32.mrf.mxu0
      %430 = vmatprep.mubr.f32.mxu0 0.0
      %431 = vmatmul.mubr.f32.gmra.mxu0 %v291
      %v432 = vpop.f32.mrf.mxu0
      %v433 = vadd.f32 %v245, %v432
      %v434 = vpop.f32.mrf.mxu0
      %435 = vmatprep.mubr.f32.mxu0 0.0
      %436 = vmatmul.mubr.f32.gmra.mxu0 %v294
      %v437 = vpop.f32.mrf.mxu0
      %v438 = vadd.f32 %v245, %v437
      %v439 = vpop.f32.mrf.mxu0
      %440 = vdwg.mxu0
      %v441 = vld [vmem:[%s215] sm:$0xff]
      %v442 = vld [vmem:[%s215 + $0x8] sm:$0xff]
      %v443 = vld [vmem:[%s215 + $0x10] sm:$0xff]
      %v444 = vld [vmem:[%s215 + $0x18] sm:$0xff]
      %v445 = vld [vmem:[%s215 + $0x20] sm:$0xff]
      %v446 = vld [vmem:[%s215 + $0x28] sm:$0xff]
      %v447 = vld [vmem:[%s215 + $0x30] sm:$0xff]
      %v448 = vld [vmem:[%s215 + $0x38] sm:$0xff]
      %v449 = vld [vmem:[%s215 + $0x40] sm:$0xff]
      %v450 = vld [vmem:[%s215 + $0x48] sm:$0xff]
      %v451 = vld [vmem:[%s215 + $0x50] sm:$0xff]
      %v452 = vld [vmem:[%s215 + $0x58] sm:$0xff]
      %v453 = vld [vmem:[%s215 + $0x60] sm:$0xff]
      %v454 = vld [vmem:[%s215 + $0x68] sm:$0xff]
      %v455 = vld [vmem:[%s215 + $0x70] sm:$0xff]
      %v456 = vld [vmem:[%s215 + $0x78] sm:$0xff]
      %vm457 = vcmask 130048
      %458 = vst.msk [vmem:[%s221] sm:$0xff] %vm457, %v441
      %459 = vst.msk [vmem:[%s221 + $0x8] sm:$0xff] %vm457, %v442
      %460 = vst.msk [vmem:[%s221 + $0x10] sm:$0xff] %vm457, %v443
      %461 = vst.msk [vmem:[%s221 + $0x18] sm:$0xff] %vm457, %v444
      %462 = vst.msk [vmem:[%s221 + $0x20] sm:$0xff] %vm457, %v445
      %463 = vst.msk [vmem:[%s221 + $0x28] sm:$0xff] %vm457, %v446
      %464 = vst.msk [vmem:[%s221 + $0x30] sm:$0xff] %vm457, %v447
      %465 = vst.msk [vmem:[%s221 + $0x38] sm:$0xff] %vm457, %v448
      %466 = vst.msk [vmem:[%s221 + $0x40] sm:$0xff] %vm457, %v449
      %467 = vst.msk [vmem:[%s221 + $0x48] sm:$0xff] %vm457, %v450
      %468 = vst.msk [vmem:[%s221 + $0x50] sm:$0xff] %vm457, %v451
      %469 = vst.msk [vmem:[%s221 + $0x58] sm:$0xff] %vm457, %v452
      %470 = vst.msk [vmem:[%s221 + $0x60] sm:$0xff] %vm457, %v453
      %471 = vst.msk [vmem:[%s221 + $0x68] sm:$0xff] %vm457, %v454
      %472 = vst.msk [vmem:[%s221 + $0x70] sm:$0xff] %vm457, %v455
      %473 = vst.msk [vmem:[%s221 + $0x78] sm:$0xff] %vm457, %v456
      %490 = vrot.lane.b32.xlu0 %v363, 16
      %v491 = vpop.permute.xlu0 %490
      %492 = vrot.lane.b32.xlu0 %v368, 16
      %v493 = vpop.permute.xlu0 %492
      %494 = vrot.lane.b32.xlu0 %v373, 16
      %v495 = vpop.permute.xlu0 %494
      %496 = vrot.lane.b32.xlu0 %v378, 16
      %v497 = vpop.permute.xlu0 %496
      %498 = vrot.lane.b32.xlu0 %v383, 16
      %v499 = vpop.permute.xlu0 %498
      %500 = vrot.lane.b32.xlu0 %v388, 16
      %v501 = vpop.permute.xlu0 %500
      %502 = vrot.lane.b32.xlu0 %v393, 16
      %v503 = vpop.permute.xlu0 %502
      %504 = vrot.lane.b32.xlu0 %v398, 16
      %v505 = vpop.permute.xlu0 %504
      %506 = vrot.lane.b32.xlu0 %v403, 16
      %v507 = vpop.permute.xlu0 %506
      %508 = vrot.lane.b32.xlu0 %v408, 16
      %v509 = vpop.permute.xlu0 %508
      %510 = vrot.lane.b32.xlu0 %v413, 16
      %v511 = vpop.permute.xlu0 %510
      %512 = vrot.lane.b32.xlu0 %v418, 16
      %v513 = vpop.permute.xlu0 %512
      %514 = vrot.lane.b32.xlu0 %v423, 16
      %v515 = vpop.permute.xlu0 %514
      %516 = vrot.lane.b32.xlu0 %v428, 16
      %v517 = vpop.permute.xlu0 %516
      %518 = vrot.lane.b32.xlu0 %v433, 16
      %v519 = vpop.permute.xlu0 %518
      %520 = vrot.lane.b32.xlu0 %v438, 16
      %v521 = vpop.permute.xlu0 %520
      %vm538 = vcmask 261248
      %539 = vst.msk [vmem:[%s221] sm:$0xff] %vm538, %v491
      %540 = vst.msk [vmem:[%s221 + $0x8] sm:$0xff] %vm538, %v493
      %541 = vst.msk [vmem:[%s221 + $0x10] sm:$0xff] %vm538, %v495
      %542 = vst.msk [vmem:[%s221 + $0x18] sm:$0xff] %vm538, %v497
      %543 = vst.msk [vmem:[%s221 + $0x20] sm:$0xff] %vm538, %v499
      %544 = vst.msk [vmem:[%s221 + $0x28] sm:$0xff] %vm538, %v501
      %545 = vst.msk [vmem:[%s221 + $0x30] sm:$0xff] %vm538, %v503
      %546 = vst.msk [vmem:[%s221 + $0x38] sm:$0xff] %vm538, %v505
      %547 = vst.msk [vmem:[%s221 + $0x40] sm:$0xff] %vm538, %v507
      %548 = vst.msk [vmem:[%s221 + $0x48] sm:$0xff] %vm538, %v509
      %549 = vst.msk [vmem:[%s221 + $0x50] sm:$0xff] %vm538, %v511
      %550 = vst.msk [vmem:[%s221 + $0x58] sm:$0xff] %vm538, %v513
      %551 = vst.msk [vmem:[%s221 + $0x60] sm:$0xff] %vm538, %v515
      %552 = vst.msk [vmem:[%s221 + $0x68] sm:$0xff] %vm538, %v517
      %553 = vst.msk [vmem:[%s221 + $0x70] sm:$0xff] %vm538, %v519
      %554 = vst.msk [vmem:[%s221 + $0x78] sm:$0xff] %vm538, %v521
      %s555 = smul.u32 16, %s15
      %p556 = scmp.lt.s32.totalorder %s555, 63
      %s557 = scalar_select %p556, %s555, 63
      %s558 = smul.addr %s557, 8
      %s559 = scalar_lea.vmem %s4, %s558
      // Predicated region
      $region37: #{tpu_custom_call.1} parent=35 // pred_check
        %p560 = pneg %p127
      $region38: #{tpu_custom_call.1} parent=35 // pred_check_branch
        %562 = sbr.rel (%p560) target = $region40
      $region39: #{tpu_custom_call.1} parent=35 // pred_region
        %s563 = smul.u32 16, %s15
      $region40: #{tpu_custom_call.1} parent=35 // pred_fallthru
        _
    $region36: #{tpu_custom_call.1} parent=5 // pred_fallthru
      _
    %p564 = scmp.le.s32.totalorder 2, %s10
    // Predicated region
    $region41: #{tpu_custom_call.1} parent=5 // pred_check
      %p565 = pneg %p564
    $region42: #{tpu_custom_call.1} parent=5 // pred_check_branch
      %567 = sbr.rel (%p565) target = $region44
    $region43: #{tpu_custom_call.1} parent=5 // pred_region
      %s568 = ssub.s32 %s10, 2
      // Predicated region
      $region45: #{tpu_custom_call.1} parent=43 // pred_check
        %p569 = pneg %p133
      $region46: #{tpu_custom_call.1} parent=43 // pred_check_branch
        %571 = sbr.rel (%p569) target = $region48
      $region47: #{tpu_custom_call.1} parent=43 // pred_region
        %s572 = smul.u32 16, %s16
        %p573 = scmp.lt.s32.totalorder %s572, 63
        %s574 = scalar_select %p573, %s572, 63
        %s575 = smul.addr %s574, 8
        %s576 = scalar_lea.vmem %s4, %s575
      $region48: #{tpu_custom_call.1} parent=43 // pred_fallthru
        _
    $region44: #{tpu_custom_call.1} parent=5 // pred_fallthru
      _
  $region6: #{tpu_custom_call.1} parent=0 // loop_footer
    %s14 = sadd.s32 1, %s10
  $region7: #{tpu_custom_call.1} parent=0 // loop_footer_branch
    %9 = sbr.rel target = $region3
  $region8: #{tpu_custom_call.1} parent=0 // loop_exit
    _

</llo_original>
